<compile_context>
chip_gen: v7x
topology: tpu7x:2x2x1
jax: 0.10.0
libtpu: 0.0.40
codegen_flags: <defaults>
</compile_context>

<pallas_src>
import jax
import jax.numpy as jnp
from jax.experimental import pallas as pl
from jax.experimental.pallas import tpu as pltpu

EPS = 1e-6                       # ConvNeXt LayerNorm eps
_SQRT_2_OVER_PI = 0.7978845608028654
_DW_LPAD = 8                     # left halo of dwconv scratch (8 -> aligned interior store)

# torchvision ConvNeXt-Base block setting: (in_ch, out_ch, num_blocks)
BLOCK_SETTING = [(128, 256, 3), (256, 512, 3), (512, 1024, 27), (1024, None, 3)]
STEM_OUT = 128


def _pick_vmem_limit():
    # v5e/v6e have 128 MiB physical VMEM -> allow ~100 MiB; v7x has 64 MiB -> 48 MiB.
    try:
        cap = pltpu.get_tpu_info().vmem_capacity_bytes
    except Exception:
        cap = 64 * 1024 * 1024
    return 100 * 1024 * 1024 if cap >= 96 * 1024 * 1024 else 48 * 1024 * 1024


VMEM_LIMIT = _pick_vmem_limit()


def _round_up(x, m):
    return (x + m - 1) // m * m


def _choose_tm(m, cap):
    # Row-tile: `cap` when M is large, otherwise the smallest 8-multiple >= M.
    return cap if m >= cap else max(8, _round_up(m, 8))


def _pad_rows(x, m_pad):
    m = x.shape[0]
    return x if m == m_pad else jnp.pad(x, ((0, m_pad - m), (0, 0)))


# ----------------------------------------------------------------------------
# in-kernel helpers
# ----------------------------------------------------------------------------
def _gelu_tanh(x):
    # tanh-approximate GELU (EUP tanh, frees VALU slots).
    # TODO(synk): deviates from torch's exact erf-GELU by ~1e-3*|x|.
    return 0.5 * x * (1.0 + jnp.tanh(_SQRT_2_OVER_PI * (x + 0.044715 * x * x * x)))


def _ln(x, w, b):
    mu = jnp.mean(x, axis=-1, keepdims=True)
    var = jnp.mean((x - mu) ** 2, axis=-1, keepdims=True)
    return (x - mu) * jax.lax.rsqrt(var + EPS) * w + b


# ----------------------------------------------------------------------------
# Pallas kernels
# ----------------------------------------------------------------------------
def _stem_kernel(a_ref, w_ref, b_ref, lnw_ref, lnb_ref, o_ref):
    # patch-matmul (Conv2d 3->128, k=4, s=4) + bias + fused LayerNorm2d(128)
    y = jnp.dot(a_ref[...], w_ref[...],
                preferred_element_type=jnp.float32) + b_ref[...]
    o_ref[...] = _ln(y, lnw_ref[...], lnb_ref[...])


def _dwconv_ln_kernel(x_ref, w_ref, b_ref, lnw_ref, lnb_ref, o_ref, xp_ref):
    # depthwise 7x7 conv (pad=3) + bias + fused LayerNorm; output stored bf16.
    # Padding lives in a VMEM scratch; only the halo is zero-filled (the
    # interior is overwritten by the aligned input-tile store).
    H, W, C = o_ref.shape[1], o_ref.shape[2], o_ref.shape[3]
    Wp = xp_ref.shape[1]
    L = _DW_LPAD
    xp_ref[0:3, :, :] = jnp.zeros((3, Wp, C), jnp.float32)           # top halo rows
    xp_ref[3 + H:H + 6, :, :] = jnp.zeros((3, Wp, C), jnp.float32)   # bottom halo rows
    xp_ref[3:3 + H, 0:L, :] = jnp.zeros((H, L, C), jnp.float32)      # left halo cols
    xp_ref[3:3 + H, L + W:Wp, :] = jnp.zeros((H, Wp - L - W, C), jnp.float32)
    xp_ref[3:3 + H, L:L + W, :] = x_ref[0]                           # aligned interior store

    acc = jnp.zeros((H, W, C), jnp.float32)
    # One column-shifted slab per kx tap (7 loads instead of 49); the 7 ky taps
    # are cheap leading-axis slices of that slab.
    # TODO(synk): the 7 sublane-unaligned slab loads could become XLU
    #             pltpu.roll shifts; spatial row tiling (v7x megacore) not done.
    for kx in range(7):
        win = xp_ref[:, L - 3 + kx:L - 3 + kx + W, :]                # (H+6, W, C)
        for ky in range(7):
            acc = acc + win[ky:ky + H] * w_ref[ky * 7 + kx]

    # LayerNorm directly on the 3-D accumulator (no (H*W, C) reshape round trip).
    yn = _ln(acc + b_ref[0], lnw_ref[0], lnb_ref[0])
    o_ref[0] = yn.astype(o_ref.dtype)


def _cnblock_mlp_res_kernel(yn_ref, x_ref, w1_ref, b1_ref, w2_ref, b2_ref,
                            ls_ref, o_ref):
    # Weight-resident CNBlock MLP (C <= 512): Linear(C,4C)->GELU->Linear(4C,C)
    # -> layer_scale -> + residual.  Grid: (M tiles ["parallel"],).
    h = jnp.dot(yn_ref[...], w1_ref[...],
                preferred_element_type=jnp.float32) + b1_ref[...]
    h = _gelu_tanh(h)
    y = jnp.dot(h.astype(jnp.bfloat16), w2_ref[...],
                preferred_element_type=jnp.float32) + b2_ref[...]
    o_ref[...] = x_ref[...] + ls_ref[...] * y


def _cnblock_mlp_red_kernel(yn_ref, x_ref, w1_ref, b1_ref, w2_ref, b2_ref,
                            ls_ref, o_ref, acc_ref):
    # Hidden-tiled CNBlock MLP (C == 1024).
    # Grid: (M tiles ["parallel"], hidden tiles ["arbitrary", innermost]).
    j = pl.program_id(1)

    @pl.when(j == 0)
    def _():
        acc_ref[...] = jnp.zeros_like(acc_ref)

    h = jnp.dot(yn_ref[...], w1_ref[...],
                preferred_element_type=jnp.float32) + b1_ref[...]
    h = _gelu_tanh(h)
    acc_ref[...] += jnp.dot(h.astype(jnp.bfloat16), w2_ref[...],
                            preferred_element_type=jnp.float32)

    @pl.when(j == pl.num_programs(1) - 1)
    def _():
        o_ref[...] = x_ref[...] + ls_ref[...] * (acc_ref[...] + b2_ref[...])


def _downsample_kernel(p_ref, lnw_ref, lnb_ref, w_ref, b_ref, o_ref):
    # fused LayerNorm2d(C) + Conv2d(C, 2C, k=2, s=2) on 2x2 patch rows.
    # LN per pixel over C, then a single (tm, 4C)@(4C, 2C) MXU matmul.
    C = lnw_ref.shape[-1]
    segs = []
    for p in range(4):
        seg = p_ref[:, p * C:(p + 1) * C].astype(jnp.float32)
        segs.append(_ln(seg, lnw_ref[...], lnb_ref[...]).astype(jnp.bfloat16))
    pn = jnp.concatenate(segs, axis=-1)
    o_ref[...] = jnp.dot(pn, w_ref[...],
                         preferred_element_type=jnp.float32) + b_ref[...]


def _avgpool_kernel(x_ref, o_ref):
    # x_ref: (N, H*W, C) -> o_ref: (N, C)
    hw = x_ref.shape[1]
    o_ref[...] = jnp.sum(x_ref[...], axis=1) * (1.0 / hw)


# ----------------------------------------------------------------------------
# pallas_call wrappers
# ----------------------------------------------------------------------------
def _stem_conv_ln(patches, w, b, ln_w, ln_b):
    M, K = patches.shape
    N = w.shape[1]
    tm = _choose_tm(M, 512)
    mp = _round_up(M, tm)
    patches = _pad_rows(patches, mp)
    out = pl.pallas_call(
        _stem_kernel,
        out_shape=jax.ShapeDtypeStruct((mp, N), jnp.float32),
        grid=(mp // tm,),
        in_specs=[
            pl.BlockSpec((tm, K), lambda i: (i, 0)),
            pl.BlockSpec((K, N), lambda i: (0, 0)),
            pl.BlockSpec((1, N), lambda i: (0, 0)),
            pl.BlockSpec((1, N), lambda i: (0, 0)),
            pl.BlockSpec((1, N), lambda i: (0, 0)),
        ],
        out_specs=pl.BlockSpec((tm, N), lambda i: (i, 0)),
        compiler_params=pltpu.CompilerParams(
            dimension_semantics=("parallel",), vmem_limit_bytes=VMEM_LIMIT),
    )(patches, w, b.reshape(1, N), ln_w.reshape(1, N), ln_b.reshape(1, N))
    return out[:M] if mp != M else out


def _dwconv7x7_ln(x_nhwc, w49c, b, ln_w, ln_b):
    N, H, W, C = x_nhwc.shape
    wp = _round_up(_DW_LPAD + W + 3, 8)
    return pl.pallas_call(
        _dwconv_ln_kernel,
        out_shape=jax.ShapeDtypeStruct((N, H, W, C), jnp.bfloat16),
        grid=(N,),
        in_specs=[
            pl.BlockSpec((1, H, W, C), lambda n: (n, 0, 0, 0)),
            pl.BlockSpec((49, C), lambda n: (0, 0)),
            pl.BlockSpec((1, C), lambda n: (0, 0)),
            pl.BlockSpec((1, C), lambda n: (0, 0)),
            pl.BlockSpec((1, C), lambda n: (0, 0)),
        ],
        out_specs=pl.BlockSpec((1, H, W, C), lambda n: (n, 0, 0, 0)),
        scratch_shapes=[pltpu.VMEM((H + 6, wp, C), jnp.float32)],
        compiler_params=pltpu.CompilerParams(
            dimension_semantics=("parallel",), vmem_limit_bytes=VMEM_LIMIT),
    )(x_nhwc, w49c, b.reshape(1, C), ln_w.reshape(1, C), ln_b.reshape(1, C))


def _cnblock_mlp(yn2d, x2d, w1, b1, w2, b2, ls):
    M, C = x2d.shape
    hdim = w1.shape[1]
    tm = _choose_tm(M, 256)
    mp = _round_up(M, tm)
    yn2d = _pad_rows(yn2d, mp)
    x2d = _pad_rows(x2d, mp)
    n_m = mp // tm
    w_bytes = 2 * C * hdim * 2    # w1 + w2 in bf16
    if w_bytes <= 8 * 1024 * 1024:
        # Weight-resident path: w1/w2 index maps are grid-invariant -> DMA'd once.
        out = pl.pallas_call(
            _cnblock_mlp_res_kernel,
            out_shape=jax.ShapeDtypeStruct((mp, C), jnp.float32),
            grid=(n_m,),
            in_specs=[
                pl.BlockSpec((tm, C), lambda i: (i, 0)),      # normalized dwconv out (bf16)
                pl.BlockSpec((tm, C), lambda i: (i, 0)),      # residual input (f32)
                pl.BlockSpec((C, hdim), lambda i: (0, 0)),    # w1 (resident, bf16)
                pl.BlockSpec((1, hdim), lambda i: (0, 0)),    # b1
                pl.BlockSpec((hdim, C), lambda i: (0, 0)),    # w2 (resident, bf16)
                pl.BlockSpec((1, C), lambda i: (0, 0)),       # b2
                pl.BlockSpec((1, C), lambda i: (0, 0)),       # layer scale
            ],
            out_specs=pl.BlockSpec((tm, C), lambda i: (i, 0)),
            compiler_params=pltpu.CompilerParams(
                dimension_semantics=("parallel",), vmem_limit_bytes=VMEM_LIMIT),
        )(yn2d, x2d, w1, b1.reshape(1, hdim), w2, b2.reshape(1, C),
          ls.reshape(1, C))
    else:
        th = 2048 if VMEM_LIMIT >= 96 * 1024 * 1024 else 1024
        th = min(th, hdim)
        while hdim % th:
            th //= 2
        n_h = hdim // th
        out = pl.pallas_call(
            _cnblock_mlp_red_kernel,
            out_shape=jax.ShapeDtypeStruct((mp, C), jnp.float32),
            grid=(n_m, n_h),
            in_specs=[
                pl.BlockSpec((tm, C), lambda i, j: (i, 0)),
                pl.BlockSpec((tm, C), lambda i, j: (i, 0)),
                pl.BlockSpec((C, th), lambda i, j: (0, j)),
                pl.BlockSpec((1, th), lambda i, j: (0, j)),
                pl.BlockSpec((th, C), lambda i, j: (j, 0)),
                pl.BlockSpec((1, C), lambda i, j: (0, 0)),
                pl.BlockSpec((1, C), lambda i, j: (0, 0)),
            ],
            out_specs=pl.BlockSpec((tm, C), lambda i, j: (i, 0)),
            scratch_shapes=[pltpu.VMEM((tm, C), jnp.float32)],
            compiler_params=pltpu.CompilerParams(
                dimension_semantics=("parallel", "arbitrary"),
                vmem_limit_bytes=VMEM_LIMIT),
        )(yn2d, x2d, w1, b1.reshape(1, hdim), w2, b2.reshape(1, C),
          ls.reshape(1, C))
    return out[:M] if mp != M else out


def _downsample(patches, ln_w, ln_b, w, b):
    M, K4 = patches.shape
    C = ln_w.shape[0]
    N = w.shape[1]
    tm = _choose_tm(M, 256)
    mp = _round_up(M, tm)
    patches = _pad_rows(patches, mp)
    out = pl.pallas_call(
        _downsample_kernel,
        out_shape=jax.ShapeDtypeStruct((mp, N), jnp.float32),
        grid=(mp // tm,),
        in_specs=[
            pl.BlockSpec((tm, K4), lambda i: (i, 0)),
            pl.BlockSpec((1, C), lambda i: (0, 0)),
            pl.BlockSpec((1, C), lambda i: (0, 0)),
            pl.BlockSpec((K4, N), lambda i: (0, 0)),
            pl.BlockSpec((1, N), lambda i: (0, 0)),
        ],
        out_specs=pl.BlockSpec((tm, N), lambda i: (i, 0)),
        compiler_params=pltpu.CompilerParams(
            dimension_semantics=("parallel",), vmem_limit_bytes=VMEM_LIMIT),
    )(patches, ln_w.reshape(1, C), ln_b.reshape(1, C), w, b.reshape(1, N))
    return out[:M] if mp != M else out


def _avgpool(x_nhwc):
    N, H, W, C = x_nhwc.shape
    out = pl.pallas_call(
        _avgpool_kernel,
        out_shape=jax.ShapeDtypeStruct((N, C), jnp.float32),
        grid=(1,),
        in_specs=[pl.BlockSpec((N, H * W, C), lambda i: (0, 0, 0))],
        out_specs=pl.BlockSpec((N, C), lambda i: (0, 0)),
    )(x_nhwc.reshape(N, H * W, C))
    return out.reshape(N, C, 1, 1)   # NCHW, matches nn.AdaptiveAvgPool2d(1)


# ----------------------------------------------------------------------------
# glue (reshapes / weight layout) + jitted stage functions
# ----------------------------------------------------------------------------
def _patchify(x_nhwc, k):
    # non-overlapping k x k patches (stride == kernel size); each row is
    # k*k contiguous C-chunks ordered (ky, kx).
    N, H, W, C = x_nhwc.shape
    Ho, Wo = H // k, W // k
    p = x_nhwc.reshape(N, Ho, k, Wo, k, C).transpose(0, 1, 3, 2, 4, 5)
    return p.reshape(N * Ho * Wo, k * k * C), (N, Ho, Wo)


def _conv_to_matrix(w_pt):
    # (Cout, Cin, k, k) PyTorch layout -> (k*k*Cin, Cout) matmul layout
    cout, cin, k, _ = w_pt.shape
    return jnp.transpose(w_pt, (2, 3, 1, 0)).reshape(k * k * cin, cout)


def _dwconv_to_matrix(w_pt):
    # (C, 1, 7, 7) depthwise layout -> (49, C)
    c = w_pt.shape[0]
    return jnp.transpose(w_pt[:, 0, :, :], (1, 2, 0)).reshape(49, c)


@jax.jit
def stem_forward(x_nchw, w, b, ln_w, ln_b):
    x = jnp.transpose(x_nchw, (0, 2, 3, 1))
    patches, (N, Ho, Wo) = _patchify(x, 4)
    y = _stem_conv_ln(patches.astype(jnp.bfloat16), w, b, ln_w, ln_b)
    return y.reshape(N, Ho, Wo, -1)


@jax.jit
def cnblock_forward(x_nhwc, dw_w, dw_b, ln_w, ln_b, w1, b1, w2, b2, ls):
    # CNBlock: dwconv7x7 (+fused LN, bf16 out) -> Linear(C,4C) -> GELU ->
    #          Linear(4C,C) -> layer_scale -> residual.
    # Stochastic depth is identity at inference (eval mode), so it is omitted.
    # TODO(synk): full dwconv->MLP fusion (no HBM round trip of yn) not done.
    N, H, W, C = x_nhwc.shape
    yn = _dwconv7x7_ln(x_nhwc, dw_w, dw_b, ln_w, ln_b)
    out = _cnblock_mlp(yn.reshape(N * H * W, C), x_nhwc.reshape(N * H * W, C),
                       w1, b1, w2, b2, ls)
    return out.reshape(N, H, W, C)


@jax.jit
def downsample_forward(x_nhwc, ln_w, ln_b, w, b):
    # LayerNorm2d(C) + Conv2d(C, 2C, k=2, s=2), LN fused into the matmul kernel
    patches, (N, Ho, Wo) = _patchify(x_nhwc, 2)
    y = _downsample(patches.astype(jnp.bfloat16), ln_w, ln_b, w, b)
    return y.reshape(N, Ho, Wo, -1)


@jax.jit
def avgpool_forward(x_nhwc):
    return _avgpool(x_nhwc)


def net_forward(x_nchw, params):
    """Equivalent of Net.forward: features(x) then avgpool; returns NCHW."""
    s = params["stem"]
    h = stem_forward(x_nchw, s["w"], s["b"], s["ln_w"], s["ln_b"])
    for stage in params["stages"]:
        for blk in stage["blocks"]:
            h = cnblock_forward(h, blk["dw_w"], blk["dw_b"], blk["ln_w"],
                                blk["ln_b"], blk["w1"], blk["b1"],
                                blk["w2"], blk["b2"], blk["ls"])
        ds = stage["downsample"]
        if ds is not None:
            h = downsample_forward(h, ds["ln_w"], ds["ln_b"], ds["w"], ds["b"])
    return avgpool_forward(h)


# ----------------------------------------------------------------------------
# deterministic parameter init (synthetic; no checkpoint load).  Weights that
# feed the MXU are stored in bf16 (matmul layout), as a real checkpoint would
# be converted once at load time.  LN params, biases, layer-scale and the
# depthwise (VPU) weights stay f32.
# ----------------------------------------------------------------------------
def init_params(key):
    def normal(k, shape, std=0.02):
        return std * jax.random.normal(k, shape, jnp.float32)

    key, sk = jax.random.split(key)
    params = {
        "stem": {
            "w": _conv_to_matrix(normal(sk, (STEM_OUT, 3, 4, 4))).astype(jnp.bfloat16),
            "b": jnp.zeros((STEM_OUT,), jnp.float32),
            "ln_w": jnp.ones((STEM_OUT,), jnp.float32),
            "ln_b": jnp.zeros((STEM_OUT,), jnp.float32),
        },
        "stages": [],
    }
    for cin, cout, n_blocks in BLOCK_SETTING:
        blocks = []
        for _ in range(n_blocks):
            key, k1, k2, k3 = jax.random.split(key, 4)
            blocks.append({
                "dw_w": _dwconv_to_matrix(normal(k1, (cin, 1, 7, 7))),  # f32 (VPU taps)
                "dw_b": jnp.zeros((cin,), jnp.float32),
                "ln_w": jnp.ones((cin,), jnp.float32),
                "ln_b": jnp.zeros((cin,), jnp.float32),
                "w1": normal(k2, (cin, 4 * cin)).astype(jnp.bfloat16),
                "b1": jnp.zeros((4 * cin,), jnp.float32),
                "w2": normal(k3, (4 * cin, cin)).astype(jnp.bfloat16),
                "b2": jnp.zeros((cin,), jnp.float32),
                "ls": jnp.full((cin,), 1e-6, jnp.float32),  # ConvNeXt layer-scale
            })
        ds = None
        if cout is not None:
            key, k4 = jax.random.split(key)
            ds = {
                "ln_w": jnp.ones((cin,), jnp.float32),
                "ln_b": jnp.zeros((cin,), jnp.float32),
                "w": _conv_to_matrix(normal(k4, (cout, cin, 2, 2))).astype(jnp.bfloat16),
                "b": jnp.zeros((cout,), jnp.float32),
            }
        params["stages"].append({"blocks": blocks, "downsample": ds})
    return params


if __name__ == "__main__":
    key = jax.random.PRNGKey(0)
    pkey, xkey = jax.random.split(key)
    params = init_params(pkey)
    # Small NCHW input (batch=2, 3 channels, 32x32 spatial); spatial /32 -> 1x1.
    x = jax.random.normal(xkey, (2, 3, 32, 32), jnp.float32)
    out = net_forward(x, params)
    out = jax.block_until_ready(out)
    assert out.shape == (2, 1024, 1, 1), out.shape
    assert bool(jnp.all(jnp.isfinite(out)))
    print("KERNEL_OK")
</pallas_src>

<mosaic_0001>
module attributes {stable_mosaic.version = 11 : i64} {
  func.func @_stem_kernel(%arg0: i32, %arg1: memref<128x48xbf16, #tpu.memory_space<vmem>>, %arg2: memref<48x128xbf16, #tpu.memory_space<vmem>>, %arg3: memref<1x128xf32, #tpu.memory_space<vmem>>, %arg4: memref<1x128xf32, #tpu.memory_space<vmem>>, %arg5: memref<1x128xf32, #tpu.memory_space<vmem>>, %arg6: memref<128x128xf32, #tpu.memory_space<vmem>>) attributes {dimension_semantics = [#tpu.dimension_semantics<parallel>], iteration_bounds = array<i64: 1>, scalar_prefetch = 0 : i64, scratch_operands = 0 : i64, tpu.core_type = #tpu.core_type<tc>, window_params = [{transform_indices = @transform_0, window_bounds = array<i64: 128, 48>}, {pipeline_mode = #tpu.pipeline_mode<synchronous>, transform_indices = @transform_1, window_bounds = array<i64: 48, 128>}, {pipeline_mode = #tpu.pipeline_mode<synchronous>, transform_indices = @transform_2, window_bounds = array<i64: 1, 128>}, {pipeline_mode = #tpu.pipeline_mode<synchronous>, transform_indices = @transform_3, window_bounds = array<i64: 1, 128>}, {pipeline_mode = #tpu.pipeline_mode<synchronous>, transform_indices = @transform_4, window_bounds = array<i64: 1, 128>}, {transform_indices = @transform_5, window_bounds = array<i64: 128, 128>}]} {
    %c0 = arith.constant 0 : index
    %c0_0 = arith.constant 0 : index
    %0 = vector.load %arg1[%c0, %c0_0] : memref<128x48xbf16, #tpu.memory_space<vmem>>, vector<128x48xbf16>
    %c0_1 = arith.constant 0 : index
    %c0_2 = arith.constant 0 : index
    %1 = vector.load %arg2[%c0_1, %c0_2] : memref<48x128xbf16, #tpu.memory_space<vmem>>, vector<48x128xbf16>
    %cst = arith.constant dense<0.000000e+00> : vector<128x128xf32>
    %2 = tpu.matmul %0, %1, %cst {dimension_numbers = #tpu.dot_dimension_numbers<[1], [0], [0], [1], [0, 0, 1, 1], [], []>} : vector<128x48xbf16>, vector<48x128xbf16>, vector<128x128xf32> -> vector<128x128xf32>
    %c0_3 = arith.constant 0 : index
    %c0_4 = arith.constant 0 : index
    %3 = vector.load %arg3[%c0_3, %c0_4] : memref<1x128xf32, #tpu.memory_space<vmem>>, vector<1x128xf32>
    %4 = vector.broadcast %3 : vector<1x128xf32> to vector<128x128xf32>
    %5 = arith.addf %2, %4 : vector<128x128xf32>
    %c0_5 = arith.constant 0 : index
    %c0_6 = arith.constant 0 : index
    %6 = vector.load %arg4[%c0_5, %c0_6] : memref<1x128xf32, #tpu.memory_space<vmem>>, vector<1x128xf32>
    %c0_7 = arith.constant 0 : index
    %c0_8 = arith.constant 0 : index
    %7 = vector.load %arg5[%c0_7, %c0_8] : memref<1x128xf32, #tpu.memory_space<vmem>>, vector<1x128xf32>
    %cst_9 = arith.constant dense<0.000000e+00> : vector<128xf32>
    %8 = vector.multi_reduction <add>, %5, %cst_9 [1] : vector<128x128xf32> to vector<128xf32>
    %9 = vector.shape_cast %8 : vector<128xf32> to vector<128x1xf32>
    %cst_10 = arith.constant 1.280000e+02 : f32
    %10 = vector.broadcast %cst_10 : f32 to vector<128x1xf32>
    %11 = arith.divf %9, %10 : vector<128x1xf32>
    %12 = vector.broadcast %11 : vector<128x1xf32> to vector<128x128xf32>
    %13 = arith.subf %5, %12 : vector<128x128xf32>
    %14 = arith.mulf %13, %13 : vector<128x128xf32>
    %cst_11 = arith.constant dense<0.000000e+00> : vector<128xf32>
    %15 = vector.multi_reduction <add>, %14, %cst_11 [1] : vector<128x128xf32> to vector<128xf32>
    %16 = vector.shape_cast %15 : vector<128xf32> to vector<128x1xf32>
    %cst_12 = arith.constant 1.280000e+02 : f32
    %17 = vector.broadcast %cst_12 : f32 to vector<128x1xf32>
    %18 = arith.divf %16, %17 : vector<128x1xf32>
    %19 = vector.broadcast %11 : vector<128x1xf32> to vector<128x128xf32>
    %20 = arith.subf %5, %19 : vector<128x128xf32>
    %cst_13 = arith.constant 9.99999997E-7 : f32
    %21 = vector.broadcast %cst_13 : f32 to vector<128x1xf32>
    %22 = arith.addf %18, %21 : vector<128x1xf32>
    %23 = math.rsqrt %22 : vector<128x1xf32>
    %24 = vector.broadcast %23 : vector<128x1xf32> to vector<128x128xf32>
    %25 = arith.mulf %20, %24 : vector<128x128xf32>
    %26 = vector.broadcast %6 : vector<1x128xf32> to vector<128x128xf32>
    %27 = arith.mulf %25, %26 : vector<128x128xf32>
    %28 = vector.broadcast %7 : vector<1x128xf32> to vector<128x128xf32>
    %29 = arith.addf %27, %28 : vector<128x128xf32>
    %c0_14 = arith.constant 0 : index
    %c0_15 = arith.constant 0 : index
    %30 = vector.load %arg6[%c0_14, %c0_15] : memref<128x128xf32, #tpu.memory_space<vmem>>, vector<128x128xf32>
    tpu.vector_store %arg6[%c0_14, %c0_15], %29 {strides = array<i32>} : memref<128x128xf32, #tpu.memory_space<vmem>>, vector<128x128xf32>,
    return
  }
  func.func @transform_0(%arg0: i32) -> (i32, i32) {
    %c0_i32 = arith.constant 0 : i32
    %c0_i32_0 = arith.constant 0 : i32
    return %arg0, %c0_i32 : i32, i32
  }
  func.func @transform_1(%arg0: i32) -> (i32, i32) {
    %c0_i32 = arith.constant 0 : i32
    %c0_i32_0 = arith.constant 0 : i32
    %c0_i32_1 = arith.constant 0 : i32
    return %c0_i32, %c0_i32_0 : i32, i32
  }
  func.func @transform_2(%arg0: i32) -> (i32, i32) {
    %c0_i32 = arith.constant 0 : i32
    %c0_i32_0 = arith.constant 0 : i32
    %c0_i32_1 = arith.constant 0 : i32
    return %c0_i32, %c0_i32_0 : i32, i32
  }
  func.func @transform_3(%arg0: i32) -> (i32, i32) {
    %c0_i32 = arith.constant 0 : i32
    %c0_i32_0 = arith.constant 0 : i32
    %c0_i32_1 = arith.constant 0 : i32
    return %c0_i32, %c0_i32_0 : i32, i32
  }
  func.func @transform_4(%arg0: i32) -> (i32, i32) {
    %c0_i32 = arith.constant 0 : i32
    %c0_i32_0 = arith.constant 0 : i32
    %c0_i32_1 = arith.constant 0 : i32
    return %c0_i32, %c0_i32_0 : i32, i32
  }
  func.func @transform_5(%arg0: i32) -> (i32, i32) {
    %c0_i32 = arith.constant 0 : i32
    %c0_i32_0 = arith.constant 0 : i32
    return %arg0, %c0_i32 : i32, i32
  }
}

</mosaic_0001>

<llo_original>
// kernel: stem_forward.1
$region0: #{stem_forward.1}
  #allocation0 [shape = 'u32[]', space=smem, size = 0x4, offset = 0x4, fixed_abs, tag = 'smem constant byte address 0x4 - core index']
  #allocation1 [shape = 'u32[144,128]{1,0:T(1,128)}', space=vmem, size = 0x12000, scoped, tag = 'internal scratch']
  %s0 = inlined_call_operand.vmem [shape: bf16[128,48], index: 0, kind: input, shape index: {}]
  %s1 = inlined_call_operand.vmem [shape: bf16[48,128], index: 1, kind: input, shape index: {}]
  %s2 = inlined_call_operand.vmem [shape: f32[1,128], index: 2, kind: input, shape index: {}]
  %s3 = inlined_call_operand.vmem [shape: f32[1,128], index: 3, kind: input, shape index: {}]
  %s4 = inlined_call_operand.vmem [shape: f32[1,128], index: 4, kind: input, shape index: {}]
  %s5 = inlined_call_operand.hbm [shape: f32[128,128], index: 5, kind: output, shape index: {}]
  %s6 = sld [smem:[#allocation0]]
  $region30: #{stem_forward.1} parent=0
    _
  %s8 = ssub.s32 1, %s6
  %s9 = scalar_select 0, %s8, %s6
  $region1: #{stem_forward.1} parent=0
    #allocation2 [shape = 'u8[65536]{0}', space=vmem, size = 0x10000, scoped, tag = 'output window, operand 0, single buffered']
    #allocation3 [shape = 's32[1]{0}', space=sflag, size = 0x4, scoped, tag = 'scoped memory for stem_forward.1']
    %10 = vsyncpa [#allocation3], 0
    // Predicated region
    $region2: #{stem_forward.1} parent=1 // pred_check
      _
    $region3: #{stem_forward.1} parent=1 // pred_check_branch
      %12 = sbr.rel (0) target = $region5
    $region4: #{stem_forward.1} parent=1 // pred_region
      _
    $region5: #{stem_forward.1} parent=1 // pred_fallthru
      _
    // Predicated region
    $region6: #{stem_forward.1} parent=1 // pred_check
      _
    $region7: #{stem_forward.1} parent=1 // pred_check_branch
      %14 = sbr.rel (0) target = $region9
    $region8: #{stem_forward.1} parent=1 // pred_region
      _
    $region9: #{stem_forward.1} parent=1 // pred_fallthru
      _
    // Predicated region
    $region10: #{stem_forward.1} parent=1 // pred_check
      _
    $region11: #{stem_forward.1} parent=1 // pred_check_branch
      %16 = sbr.rel (0) target = $region13
    $region12: #{stem_forward.1} parent=1 // pred_region
      _
    $region13: #{stem_forward.1} parent=1 // pred_fallthru
      _
    // Predicated region
    $region14: #{stem_forward.1} parent=1 // pred_check
      _
    $region15: #{stem_forward.1} parent=1 // pred_check_branch
      %18 = sbr.rel (0) target = $region17
    $region16: #{stem_forward.1} parent=1 // pred_region
      _
    $region17: #{stem_forward.1} parent=1 // pred_fallthru
      _
    // Predicated region
    $region18: #{stem_forward.1} parent=1 // pred_check
      _
    $region19: #{stem_forward.1} parent=1 // pred_check_branch
      %20 = sbr.rel (0) target = $region21
    $region20: #{stem_forward.1} parent=1 // pred_region
      _
    $region21: #{stem_forward.1} parent=1 // pred_fallthru
      _
    %v22 = vld [vmem:[%s0] sm:$0xf]
    %v23 = vld [vmem:[%s0 + $0x4] sm:$0xf]
    %v24 = vld [vmem:[%s0 + $0x8] sm:$0xf]
    %v25 = vld [vmem:[%s0 + $0xc] sm:$0xf]
    %v26 = vld [vmem:[%s0 + $0x10] sm:$0xf]
    %v27 = vld [vmem:[%s0 + $0x14] sm:$0xf]
    %v28 = vld [vmem:[%s0 + $0x18] sm:$0xf]
    %v29 = vld [vmem:[%s0 + $0x1c] sm:$0xf]
    %v30 = vld [vmem:[%s0 + $0x20] sm:$0xf]
    %v31 = vld [vmem:[%s0 + $0x24] sm:$0xf]
    %v32 = vld [vmem:[%s0 + $0x28] sm:$0xf]
    %v33 = vld [vmem:[%s0 + $0x2c] sm:$0xf]
    %v34 = vld [vmem:[%s0 + $0x30] sm:$0xf]
    %v35 = vld [vmem:[%s0 + $0x34] sm:$0xf]
    %v36 = vld [vmem:[%s0 + $0x38] sm:$0xf]
    %v37 = vld [vmem:[%s0 + $0x3c] sm:$0xf]
    %v38 = vld [vmem:[%s1] sm:$0xf]
    %v39 = vld [vmem:[%s1 + $0x4] sm:$0xf]
    %v40 = vld [vmem:[%s1 + $0x8] sm:$0xf]
    %v41 = vld [vmem:[%s1 + $0xc] sm:$0xf]
    %v42 = vld [vmem:[%s1 + $0x10] sm:$0xf]
    %v43 = vld [vmem:[%s1 + $0x14] sm:$0xf]
    %v44 = vld [vmem:[%s2] sm:$0x1]
    %v46 = vlaneseq
    %v47 = vshrl.u32 %v46, 7
    %v48 = vsub.s32 0, %v47
    %v49 = vrot.slane %v44, %v48
    %v67 = vunpack.c.l.b16 %v22
    %v68 = vunpack.c.l.b16 %v23
    %v69 = vunpack.c.l.b16 %v24
    %v70 = vunpack.c.l.b16 %v25
    %v71 = vunpack.c.l.b16 %v26
    %v72 = vunpack.c.l.b16 %v27
    %v73 = vunpack.c.l.b16 %v28
    %v74 = vunpack.c.l.b16 %v29
    %v75 = vunpack.c.l.b16 %v30
    %v76 = vunpack.c.l.b16 %v31
    %v77 = vunpack.c.l.b16 %v32
    %v78 = vunpack.c.l.b16 %v33
    %v79 = vunpack.c.l.b16 %v34
    %v80 = vunpack.c.l.b16 %v35
    %v81 = vunpack.c.l.b16 %v36
    %v82 = vunpack.c.l.b16 %v37
    %v83 = vpack.c.b16 %v68, %v67
    %v84 = vpack.c.b16 %v70, %v69
    %v85 = vpack.c.b16 %v72, %v71
    %v86 = vpack.c.b16 %v74, %v73
    %v87 = vpack.c.b16 %v76, %v75
    %v88 = vpack.c.b16 %v78, %v77
    %v89 = vpack.c.b16 %v80, %v79
    %v90 = vpack.c.b16 %v82, %v81
    %v97 = vunpack.c.l.b16 %v38
    %v98 = vunpack.c.l.b16 %v39
    %v99 = vunpack.c.l.b16 %v40
    %v100 = vunpack.c.l.b16 %v41
    %v101 = vunpack.c.l.b16 %v42
    %v102 = vunpack.c.l.b16 %v43
    %v103 = vpack.c.b16 %v98, %v97
    %v104 = vpack.c.b16 %v100, %v99
    %v105 = vpack.c.b16 %v102, %v101
    %vm109 = vcmask 392192
    %v111 = vsel %vm109, %v83, 0
    %v114 = vsel %vm109, %v84, 0
    %v117 = vsel %vm109, %v85, 0
    %v120 = vsel %vm109, %v86, 0
    %v123 = vsel %vm109, %v87, 0
    %v126 = vsel %vm109, %v88, 0
    %v129 = vsel %vm109, %v89, 0
    %v132 = vsel %vm109, %v90, 0
    %134 = vmatprep.subr.bf16.mxu0 0
    %135 = vmatpush1.bf16.msra.mxu0 %v103
    %136 = vmatprep.subr.bf16.mxu0 0
    %137 = vmatpush1.bf16.msra.mxu0 %v104
    %138 = vmatprep.subr.bf16.mxu0 0
    %139 = vmatpush1.bf16.msra.mxu0 %v105
    %140 = vmatprep.subr.bf16.mxu0 0
    %141 = vmatpush1.bf16.msra.mxu0 0
    %142 = vmatprep.subr.bf16.mxu0 0
    %143 = vmatpush1.bf16.msra.mxu0 0
    %144 = vmatprep.subr.bf16.mxu0 0
    %145 = vmatpush1.bf16.msra.mxu0 0
    %146 = vmatprep.subr.bf16.mxu0 0
    %147 = vmatpush1.bf16.msra.mxu0 0
    %148 = vmatprep.subr.bf16.mxu0 0
    %149 = vmatpush1.bf16.msra.mxu0 0
    %150 = vmatprep.subr.bf16.mxu0 0
    %151 = vmatpush1.bf16.msra.mxu0 0
    %152 = vmatprep.subr.bf16.mxu0 0
    %153 = vmatpush1.bf16.msra.mxu0 0
    %154 = vmatprep.subr.bf16.mxu0 0
    %155 = vmatpush1.bf16.msra.mxu0 0
    %156 = vmatprep.subr.bf16.mxu0 0
    %157 = vmatpush1.bf16.msra.mxu0 0
    %158 = vmatprep.subr.bf16.mxu0 0
    %159 = vmatpush1.bf16.msra.mxu0 0
    %160 = vmatprep.subr.bf16.mxu0 0
    %161 = vmatpush1.bf16.msra.mxu0 0
    %162 = vmatprep.subr.bf16.mxu0 0
    %163 = vmatpush1.bf16.msra.mxu0 0
    %164 = vmatprep.subr.bf16.mxu0 0
    %165 = vmatpush1.bf16.msra.mxu0 0
    %166 = vmatprep.mubr.bf16.mxu0 0
    %167 = vmatmul.mubr.bf16.gmra.mrb[0].mxu0 %v111
    %v168 = vpop.f32.mrb[0].mxu0
    %v169 = vadd.f32 %v49, %v168
    %v170 = vpop.f32.mrb[0].mxu0
    %v171 = vpop.f32.mrb[0].mxu0
    %v172 = vadd.f32 %v49, %v171
    %v173 = vpop.f32.mrb[0].mxu0
    %174 = vmatprep.mubr.bf16.mxu0 0
    %175 = vmatmul.mubr.bf16.gmra.mrb[0].mxu0 %v114
    %v176 = vpop.f32.mrb[0].mxu0
    %v177 = vadd.f32 %v49, %v176
    %v178 = vpop.f32.mrb[0].mxu0
    %v179 = vpop.f32.mrb[0].mxu0
    %v180 = vadd.f32 %v49, %v179
    %v181 = vpop.f32.mrb[0].mxu0
    %182 = vmatprep.mubr.bf16.mxu0 0
    %183 = vmatmul.mubr.bf16.gmra.mrb[0].mxu0 %v117
    %v184 = vpop.f32.mrb[0].mxu0
    %v185 = vadd.f32 %v49, %v184
    %v186 = vpop.f32.mrb[0].mxu0
    %v187 = vpop.f32.mrb[0].mxu0
    %v188 = vadd.f32 %v49, %v187
    %v189 = vpop.f32.mrb[0].mxu0
    %190 = vmatprep.mubr.bf16.mxu0 0
    %191 = vmatmul.mubr.bf16.gmra.mrb[0].mxu0 %v120
    %v192 = vpop.f32.mrb[0].mxu0
    %v193 = vadd.f32 %v49, %v192
    %v194 = vpop.f32.mrb[0].mxu0
    %v195 = vpop.f32.mrb[0].mxu0
    %v196 = vadd.f32 %v49, %v195
    %v197 = vpop.f32.mrb[0].mxu0
    %198 = vmatprep.mubr.bf16.mxu0 0
    %199 = vmatmul.mubr.bf16.gmra.mrb[0].mxu0 %v123
    %v200 = vpop.f32.mrb[0].mxu0
    %v201 = vadd.f32 %v49, %v200
    %v202 = vpop.f32.mrb[0].mxu0
    %v203 = vpop.f32.mrb[0].mxu0
    %v204 = vadd.f32 %v49, %v203
    %v205 = vpop.f32.mrb[0].mxu0
    %206 = vmatprep.mubr.bf16.mxu0 0
    %207 = vmatmul.mubr.bf16.gmra.mrb[0].mxu0 %v126
    %v208 = vpop.f32.mrb[0].mxu0
    %v209 = vadd.f32 %v49, %v208
    %v210 = vpop.f32.mrb[0].mxu0
    %v211 = vpop.f32.mrb[0].mxu0
    %v212 = vadd.f32 %v49, %v211
    %v213 = vpop.f32.mrb[0].mxu0
    %214 = vmatprep.mubr.bf16.mxu0 0
    %215 = vmatmul.mubr.bf16.gmra.mrb[0].mxu0 %v129
    %v216 = vpop.f32.mrb[0].mxu0
    %v217 = vadd.f32 %v49, %v216
    %v218 = vpop.f32.mrb[0].mxu0
    %v219 = vpop.f32.mrb[0].mxu0
    %v220 = vadd.f32 %v49, %v219
    %v221 = vpop.f32.mrb[0].mxu0
    %222 = vmatprep.mubr.bf16.mxu0 0
    %223 = vmatmul.mubr.bf16.gmra.mrb[0].mxu0 %v132
    %v224 = vpop.f32.mrb[0].mxu0
    %v225 = vadd.f32 %v49, %v224
    %v226 = vpop.f32.mrb[0].mxu0
    %v227 = vpop.f32.mrb[0].mxu0
    %v228 = vadd.f32 %v49, %v227
    %v229 = vpop.f32.mrb[0].mxu0
    %230 = vdwg.mxu0
    %v231 = vld [vmem:[%s3] sm:$0x1]
    %v232 = vld [vmem:[%s4] sm:$0x1]
    %233 = vadd.xlane.f32.xlu0 %v169
    %v234 = vpop.xlane.xlu0 %233
    %235 = vadd.xlane.f32.xlu0 %v172
    %v236 = vpop.xlane.xlu0 %235
    %237 = vadd.xlane.f32.xlu0 %v177
    %v238 = vpop.xlane.xlu0 %237
    %239 = vadd.xlane.f32.xlu0 %v180
    %v240 = vpop.xlane.xlu0 %239
    %241 = vadd.xlane.f32.xlu0 %v185
    %v242 = vpop.xlane.xlu0 %241
    %243 = vadd.xlane.f32.xlu0 %v188
    %v244 = vpop.xlane.xlu0 %243
    %245 = vadd.xlane.f32.xlu0 %v193
    %v246 = vpop.xlane.xlu0 %245
    %247 = vadd.xlane.f32.xlu0 %v196
    %v248 = vpop.xlane.xlu0 %247
    %249 = vadd.xlane.f32.xlu0 %v201
    %v250 = vpop.xlane.xlu0 %249
    %251 = vadd.xlane.f32.xlu0 %v204
    %v252 = vpop.xlane.xlu0 %251
    %253 = vadd.xlane.f32.xlu0 %v209
    %v254 = vpop.xlane.xlu0 %253
    %255 = vadd.xlane.f32.xlu0 %v212
    %v256 = vpop.xlane.xlu0 %255
    %257 = vadd.xlane.f32.xlu0 %v217
    %v258 = vpop.xlane.xlu0 %257
    %259 = vadd.xlane.f32.xlu0 %v220
    %v260 = vpop.xlane.xlu0 %259
    %261 = vadd.xlane.f32.xlu0 %v225
    %v262 = vpop.xlane.xlu0 %261
    %263 = vadd.xlane.f32.xlu0 %v228
    %v264 = vpop.xlane.xlu0 %263
    %v265 = vrcp.pop 128.0
    %v266 = vmul.f32 %v234, %v265
    %v267 = vmul.f32 %v236, %v265
    %v268 = vmul.f32 %v238, %v265
    %v269 = vmul.f32 %v240, %v265
    %v270 = vmul.f32 %v242, %v265
    %v271 = vmul.f32 %v244, %v265
    %v272 = vmul.f32 %v246, %v265
    %v273 = vmul.f32 %v248, %v265
    %v274 = vmul.f32 %v250, %v265
    %v275 = vmul.f32 %v252, %v265
    %v276 = vmul.f32 %v254, %v265
    %v277 = vmul.f32 %v256, %v265
    %v278 = vmul.f32 %v258, %v265
    %v279 = vmul.f32 %v260, %v265
    %v280 = vmul.f32 %v262, %v265
    %v281 = vmul.f32 %v264, %v265
    %v282 = vsub.f32 %v169, %v266
    %v283 = vsub.f32 %v172, %v267
    %v284 = vsub.f32 %v177, %v268
    %v285 = vsub.f32 %v180, %v269
    %v286 = vsub.f32 %v185, %v270
    %v287 = vsub.f32 %v188, %v271
    %v288 = vsub.f32 %v193, %v272
    %v289 = vsub.f32 %v196, %v273
    %v290 = vsub.f32 %v201, %v274
    %v291 = vsub.f32 %v204, %v275
    %v292 = vsub.f32 %v209, %v276
    %v293 = vsub.f32 %v212, %v277
    %v294 = vsub.f32 %v217, %v278
    %v295 = vsub.f32 %v220, %v279
    %v296 = vsub.f32 %v225, %v280
    %v297 = vsub.f32 %v228, %v281
    %v298 = vmul.f32 %v282, %v282
    %v299 = vmul.f32 %v283, %v283
    %v300 = vmul.f32 %v284, %v284
    %v301 = vmul.f32 %v285, %v285
    %v302 = vmul.f32 %v286, %v286
    %v303 = vmul.f32 %v287, %v287
    %v304 = vmul.f32 %v288, %v288
    %v305 = vmul.f32 %v289, %v289
    %v306 = vmul.f32 %v290, %v290
    %v307 = vmul.f32 %v291, %v291
    %v308 = vmul.f32 %v292, %v292
    %v309 = vmul.f32 %v293, %v293
    %v310 = vmul.f32 %v294, %v294
    %v311 = vmul.f32 %v295, %v295
    %v312 = vmul.f32 %v296, %v296
    %v313 = vmul.f32 %v297, %v297
    %314 = vadd.xlane.f32.xlu0 %v298
    %v315 = vpop.xlane.xlu0 %314
    %316 = vadd.xlane.f32.xlu0 %v299
    %v317 = vpop.xlane.xlu0 %316
    %318 = vadd.xlane.f32.xlu0 %v300
    %v319 = vpop.xlane.xlu0 %318
    %320 = vadd.xlane.f32.xlu0 %v301
    %v321 = vpop.xlane.xlu0 %320
    %322 = vadd.xlane.f32.xlu0 %v302
    %v323 = vpop.xlane.xlu0 %322
    %324 = vadd.xlane.f32.xlu0 %v303
    %v325 = vpop.xlane.xlu0 %324
    %326 = vadd.xlane.f32.xlu0 %v304
    %v327 = vpop.xlane.xlu0 %326
    %328 = vadd.xlane.f32.xlu0 %v305
    %v329 = vpop.xlane.xlu0 %328
    %330 = vadd.xlane.f32.xlu0 %v306
    %v331 = vpop.xlane.xlu0 %330
    %332 = vadd.xlane.f32.xlu0 %v307
    %v333 = vpop.xlane.xlu0 %332
    %334 = vadd.xlane.f32.xlu0 %v308
    %v335 = vpop.xlane.xlu0 %334
    %336 = vadd.xlane.f32.xlu0 %v309
    %v337 = vpop.xlane.xlu0 %336
    %338 = vadd.xlane.f32.xlu0 %v310
    %v339 = vpop.xlane.xlu0 %338
    %340 = vadd.xlane.f32.xlu0 %v311
    %v341 = vpop.xlane.xlu0 %340
    %342 = vadd.xlane.f32.xlu0 %v312
    %v343 = vpop.xlane.xlu0 %342
    %344 = vadd.xlane.f32.xlu0 %v313
    %v345 = vpop.xlane.xlu0 %344
    %v346 = vmul.f32 %v315, %v265
    %v347 = vmul.f32 %v317, %v265
    %v348 = vmul.f32 %v319, %v265
    %v349 = vmul.f32 %v321, %v265
    %v350 = vmul.f32 %v323, %v265
    %v351 = vmul.f32 %v325, %v265
    %v352 = vmul.f32 %v327, %v265
    %v353 = vmul.f32 %v329, %v265
    %v354 = vmul.f32 %v331, %v265
    %v355 = vmul.f32 %v333, %v265
    %v356 = vmul.f32 %v335, %v265
    %v357 = vmul.f32 %v337, %v265
    %v358 = vmul.f32 %v339, %v265
    %v359 = vmul.f32 %v341, %v265
    %v360 = vmul.f32 %v343, %v265
    %v361 = vmul.f32 %v345, %v265
    %v362 = vadd.f32 %v346, 1e-06
    %v363 = vadd.f32 %v347, 1e-06
    %v364 = vadd.f32 %v348, 1e-06
    %v365 = vadd.f32 %v349, 1e-06
    %v366 = vadd.f32 %v350, 1e-06
    %v367 = vadd.f32 %v351, 1e-06
    %v368 = vadd.f32 %v352, 1e-06
    %v369 = vadd.f32 %v353, 1e-06
    %v370 = vadd.f32 %v354, 1e-06
    %v371 = vadd.f32 %v355, 1e-06
    %v372 = vadd.f32 %v356, 1e-06
    %v373 = vadd.f32 %v357, 1e-06
    %v374 = vadd.f32 %v358, 1e-06
    %v375 = vadd.f32 %v359, 1e-06
    %v376 = vadd.f32 %v360, 1e-06
    %v377 = vadd.f32 %v361, 1e-06
    %v378 = vrsqrt.pop %v362
    %v379 = vrsqrt.pop %v363
    %v380 = vrsqrt.pop %v364
    %v381 = vrsqrt.pop %v365
    %v382 = vrsqrt.pop %v366
    %v383 = vrsqrt.pop %v367
    %v384 = vrsqrt.pop %v368
    %v385 = vrsqrt.pop %v369
    %v386 = vrsqrt.pop %v370
    %v387 = vrsqrt.pop %v371
    %v388 = vrsqrt.pop %v372
    %v389 = vrsqrt.pop %v373
    %v390 = vrsqrt.pop %v374
    %v391 = vrsqrt.pop %v375
    %v392 = vrsqrt.pop %v376
    %v393 = vrsqrt.pop %v377
    %v394 = vmul.f32 %v282, %v378
    %v395 = vmul.f32 %v283, %v379
    %v396 = vmul.f32 %v284, %v380
    %v397 = vmul.f32 %v285, %v381
    %v398 = vmul.f32 %v286, %v382
    %v399 = vmul.f32 %v287, %v383
    %v400 = vmul.f32 %v288, %v384
    %v401 = vmul.f32 %v289, %v385
    %v402 = vmul.f32 %v290, %v386
    %v403 = vmul.f32 %v291, %v387
    %v404 = vmul.f32 %v292, %v388
    %v405 = vmul.f32 %v293, %v389
    %v406 = vmul.f32 %v294, %v390
    %v407 = vmul.f32 %v295, %v391
    %v408 = vmul.f32 %v296, %v392
    %v409 = vmul.f32 %v297, %v393
    %v411 = vlaneseq
    %v412 = vshrl.u32 %v411, 7
    %v413 = vsub.s32 0, %v412
    %v414 = vrot.slane %v231, %v413
    %v416 = vmul.f32 %v394, %v414
    %v417 = vmul.f32 %v395, %v414
    %v418 = vmul.f32 %v396, %v414
    %v419 = vmul.f32 %v397, %v414
    %v420 = vmul.f32 %v398, %v414
    %v421 = vmul.f32 %v399, %v414
    %v422 = vmul.f32 %v400, %v414
    %v423 = vmul.f32 %v401, %v414
    %v424 = vmul.f32 %v402, %v414
    %v425 = vmul.f32 %v403, %v414
    %v426 = vmul.f32 %v404, %v414
    %v427 = vmul.f32 %v405, %v414
    %v428 = vmul.f32 %v406, %v414
    %v429 = vmul.f32 %v407, %v414
    %v430 = vmul.f32 %v408, %v414
    %v431 = vmul.f32 %v409, %v414
    %v433 = vlaneseq
    %v434 = vshrl.u32 %v433, 7
    %v435 = vsub.s32 0, %v434
    %v436 = vrot.slane %v232, %v435
    %v438 = vadd.f32 %v416, %v436
    %v439 = vadd.f32 %v417, %v436
    %v440 = vadd.f32 %v418, %v436
    %v441 = vadd.f32 %v419, %v436
    %v442 = vadd.f32 %v420, %v436
    %v443 = vadd.f32 %v421, %v436
    %v444 = vadd.f32 %v422, %v436
    %v445 = vadd.f32 %v423, %v436
    %v446 = vadd.f32 %v424, %v436
    %v447 = vadd.f32 %v425, %v436
    %v448 = vadd.f32 %v426, %v436
    %v449 = vadd.f32 %v427, %v436
    %v450 = vadd.f32 %v428, %v436
    %v451 = vadd.f32 %v429, %v436
    %v452 = vadd.f32 %v430, %v436
    %v453 = vadd.f32 %v431, %v436
    %454 = vst [vmem:[#allocation2] sm:$0xff] %v438
    %455 = vst [vmem:[#allocation2 + $0x8] sm:$0xff] %v439
    %456 = vst [vmem:[#allocation2 + $0x10] sm:$0xff] %v440
    %457 = vst [vmem:[#allocation2 + $0x18] sm:$0xff] %v441
    %458 = vst [vmem:[#allocation2 + $0x20] sm:$0xff] %v442
    %459 = vst [vmem:[#allocation2 + $0x28] sm:$0xff] %v443
    %460 = vst [vmem:[#allocation2 + $0x30] sm:$0xff] %v444
    %461 = vst [vmem:[#allocation2 + $0x38] sm:$0xff] %v445
    %462 = vst [vmem:[#allocation2 + $0x40] sm:$0xff] %v446
    %463 = vst [vmem:[#allocation2 + $0x48] sm:$0xff] %v447
    %464 = vst [vmem:[#allocation2 + $0x50] sm:$0xff] %v448
    %465 = vst [vmem:[#allocation2 + $0x58] sm:$0xff] %v449
    %466 = vst [vmem:[#allocation2 + $0x60] sm:$0xff] %v450
    %467 = vst [vmem:[#allocation2 + $0x68] sm:$0xff] %v451
    %468 = vst [vmem:[#allocation2 + $0x70] sm:$0xff] %v452
    %469 = vst [vmem:[#allocation2 + $0x78] sm:$0xff] %v453
    // Predicated region
    $region22: #{stem_forward.1} parent=1 // pred_check
      _
    $region23: #{stem_forward.1} parent=1 // pred_check_branch
      %471 = sbr.rel (0) target = $region25
    $region24: #{stem_forward.1} parent=1 // pred_region
      %s473 = ssub.s32 2048, 2048
      %474 = vsyncadd [#allocation3], %s473
      %s475 = sshll.u32 [#allocation2], 4
      %s476 = int_to_ptr.vmem [resolvable:$true] %s475
      %481 = dma.vmem_to_hbm [thread:$0]  %s476, 2048, %s5, [#allocation3], 128, 128, 8
    $region25: #{stem_forward.1} parent=1 // pred_fallthru
      _
    // Predicated region
    $region26: #{stem_forward.1} parent=1 // pred_check
      _
    $region27: #{stem_forward.1} parent=1 // pred_check_branch
      %483 = sbr.rel (0) target = $region29
    $region28: #{stem_forward.1} parent=1 // pred_region
      %484 = dma.done [#allocation3], 2048
    $region29: #{stem_forward.1} parent=1 // pred_fallthru
      _
    %485 = vsyncpa [#allocation3], 1

</llo_original>
